<compile_context>
chip_gen: v7x
topology: tpu7x:2x2x1
jax: 0.10.0
libtpu: 0.0.40
codegen_flags: <defaults>
</compile_context>

<pallas_src>
import functools

import jax
import jax.numpy as jnp
from jax.experimental import pallas as pl
from jax.experimental.pallas import tpu as pltpu


def _round_up(x, m):
    return ((x + m - 1) // m) * m


# ---------------------------------------------------------------------------
# Kernel
# ---------------------------------------------------------------------------
def _point_srb_kernel(points_ref, w1t_ref, b1_ref, w2t_ref, b2_ref, wconv_ref,
                      out_ref):
    """One grid step = TB batch rows.

    points_ref : (TB, C, N)  VMEM f32
    w1t_ref    : (N, Nrp)    VMEM f32/bf16  fc1 weight, pre-transposed, Nr padded
    b1_ref     : (1, Nrp)    VMEM f32       fc1 bias (+ folded conv bias)
    w2t_ref    : (Nrp, N)    VMEM f32/bf16  fc2 weight, pre-transposed, Nr padded
    b2_ref     : (1, N)      VMEM f32
    wconv_ref  : (C,)        SMEM f32       1x1-conv weights (scalar path)
    out_ref    : (TB, C, N)  VMEM f32/bf16
    """
    pts = points_ref[...]                              # (TB, C, N) f32

    # 1x1 Conv1d over channels as an unrolled scalar-broadcast FMA (VPU);
    # C is tiny, so an MXU pass would be ~all padding.  The conv bias was
    # folded into b1 at prep time, so no bias add is needed here.
    n_ch = pts.shape[1]
    mask = pts[:, 0, :] * wconv_ref[0]                 # (TB, N) f32
    for c in range(1, n_ch):
        mask = mask + pts[:, c, :] * wconv_ref[c]

    # fc1 + ReLU on the MXU, f32 accumulation (padded Nr columns are zero).
    h = jnp.dot(mask.astype(w1t_ref.dtype), w1t_ref[...],
                preferred_element_type=jnp.float32) + b1_ref[...]
    h = jnp.maximum(h, 0.0)                            # (TB, Nrp) f32

    # fc2 + sigmoid (EUP), f32 accumulation (padded Nr rows are zero).
    logits = jnp.dot(h.astype(w2t_ref.dtype), w2t_ref[...],
                     preferred_element_type=jnp.float32) + b2_ref[...]
    m = jax.nn.sigmoid(logits)                         # (TB, N) f32

    # Spatial re-calibration: broadcast the mask over channels (f32 VPU).
    out_ref[...] = (pts * m[:, None, :]).astype(out_ref.dtype)


# ---------------------------------------------------------------------------
# One-time parameter prep (OUTSIDE the hot path)
# ---------------------------------------------------------------------------
def prepare_params(w_conv, b_conv, w1, b1, w2, b2, weight_dtype=jnp.bfloat16):
    """Transpose + lane-pad the fc weights, fold the conv bias into b1, and
    optionally cast the fc weights to bf16 (f32 accumulation in-kernel)."""
    nr, n = w1.shape
    nrp = _round_up(nr, 128)

    w_conv_v = jnp.asarray(w_conv, jnp.float32).reshape(-1)      # (C,) for SMEM
    b_conv_s = jnp.asarray(b_conv, jnp.float32).reshape(())      # scalar

    w1_f = jnp.asarray(w1, jnp.float32)                          # (Nr, N)
    w2_f = jnp.asarray(w2, jnp.float32)                          # (N, Nr)

    # Exact fold: fc1(mask0 + b_conv) = fc1(mask0) + b_conv * sum_n W1[:, n]
    b1_fold = jnp.asarray(b1, jnp.float32) + b_conv_s * w1_f.sum(axis=1)

    w1t = jnp.zeros((n, nrp), weight_dtype).at[:, :nr].set(
        w1_f.T.astype(weight_dtype))
    b1p = jnp.zeros((1, nrp), jnp.float32).at[0, :nr].set(b1_fold)

    w2t = jnp.zeros((nrp, n), weight_dtype).at[:nr, :].set(
        w2_f.T.astype(weight_dtype))
    b2p = jnp.asarray(b2, jnp.float32).reshape(1, n)

    return w_conv_v, w1t, b1p, w2t, b2p


# ---------------------------------------------------------------------------
# Hardware / feature queries
# ---------------------------------------------------------------------------
@functools.lru_cache(maxsize=1)
def _hw_info():
    """Returns (physical VMEM bytes per TensorCore, TensorCores per chip)."""
    vmem = 128 << 20
    num_tc = 0
    try:
        info = pltpu.get_tpu_info()
        for attr in ("vmem_capacity_bytes", "vmem_bytes", "vmem_size_bytes"):
            v = getattr(info, attr, None)
            if v:
                vmem = int(v)
                break
        for attr in ("tensorcores_per_chip", "num_tensorcores", "num_cores",
                     "cores_per_chip"):
            v = getattr(info, attr, None)
            if v:
                num_tc = int(v)
                break
    except Exception:
        pass
    if num_tc <= 0:
        # Heuristic: <=64 MiB VMEM per core => v7x-class chip (2 TCs/chip).
        num_tc = 2 if vmem <= (64 << 20) else 1
    return vmem, num_tc


@functools.lru_cache(maxsize=1)
def _supports_pipeline_mode():
    try:
        pl.BlockSpec((8, 128), lambda i: (0, 0), pipeline_mode=pl.Buffered(1))
        return True
    except Exception:
        return False


# ---------------------------------------------------------------------------
# Wrapper
# ---------------------------------------------------------------------------
def point_srb(points, w_conv_v, w1t, b1p, w2t, b2p, *, out_dtype=None):
    """points: (B, C, N); params from prepare_params. Returns (B, C, N)."""
    B, C, N = points.shape
    n_w, nrp = w1t.shape
    assert n_w == N, "fc1 weight was prepared for a different n_points"
    out_dtype = jnp.dtype(out_dtype or points.dtype)
    out_item = out_dtype.itemsize

    vmem_phys, num_tc = _hw_info()
    # Headroom under physical capacity for Mosaic internal scratch:
    # ~112 MiB of 128 on v5e/v6e, ~52 MiB of 64 on v7x.
    vmem_cap = min(vmem_phys - (12 << 20), (vmem_phys * 7) // 8)

    # Resident / per-step VMEM accounting (sublane pad C->8, lane pad N->128).
    cp = _round_up(C, 8)
    nl = _round_up(N, 128)
    w_item = w1t.dtype.itemsize
    weight_tile = w_item * (_round_up(N, 8) * nrp + _round_up(nrp, 8) * nl)
    bias_tile = 4 * 8 * (nrp + nl)
    misc_bytes = 2 << 20

    use_buffered = _supports_pipeline_mode()
    wbufs_expected = 1 if use_buffered else 2

    # Per batch-row bytes: double-buffered in+out stream blocks + in-flight
    # conv/relayout temps + (TB, N)/(TB, Nrp) f32 activation intermediates.
    per_row = (2 * cp * nl * (4 + out_item)
               + cp * nl * 4
               + 8 * (nl + nrp) * 4)
    budget = max(vmem_cap - wbufs_expected * (weight_tile + bias_tile)
                 - misc_bytes, per_row)
    TB = max(1, min(B, 256, budget // per_row))

    # Megacore: only chips with >=2 TensorCores (v7x) benefit from splitting a
    # single big step; on 1-TC chips it just doubles per-step overhead.
    if num_tc >= 2 and B >= num_tc:
        steps = -(-B // TB)
        steps = _round_up(max(steps, num_tc), num_tc)
        TB = -(-B // steps)

    # Prefer a TB that divides B (no ragged last block) when it costs at most
    # a 2x smaller block; otherwise Pallas masks the ragged last block.
    d = TB
    while d > 1 and B % d != 0:
        d -= 1
    if 2 * d >= TB:
        TB = d

    grid = (pl.cdiv(B, TB),)
    stream_bytes = 2 * TB * cp * nl * (4 + out_item)
    act_bytes = 8 * TB * (nl + nrp) * 4

    def _invariant(shape, use_buf):
        ndim = len(shape)
        imap = lambda b: (0,) * ndim
        if use_buf:
            return pl.BlockSpec(shape, imap, pipeline_mode=pl.Buffered(1))
        return pl.BlockSpec(shape, imap)

    def build(use_buf):
        wbufs = 1 if use_buf else 2
        need = (wbufs * (weight_tile + bias_tile)
                + stream_bytes + act_bytes + misc_bytes)
        vmem_limit = int(min(max(need, 16 << 20), vmem_cap))
        return pl.pallas_call(
            _point_srb_kernel,
            out_shape=jax.ShapeDtypeStruct((B, C, N), out_dtype),
            grid_spec=pltpu.PrefetchScalarGridSpec(
                num_scalar_prefetch=0,
                grid=grid,
                in_specs=[
                    pl.BlockSpec((TB, C, N), lambda b: (b, 0, 0)),       # points
                    _invariant((N, nrp), use_buf),                       # fc1 W^T
                    _invariant((1, nrp), use_buf),                       # fc1 bias
                    _invariant((nrp, N), use_buf),                       # fc2 W^T
                    _invariant((1, N), use_buf),                         # fc2 bias
                    pl.BlockSpec(memory_space=pltpu.MemorySpace.SMEM),   # conv w
                ],
                out_specs=pl.BlockSpec((TB, C, N), lambda b: (b, 0, 0)),
            ),
            compiler_params=pltpu.CompilerParams(
                dimension_semantics=("parallel",),
                vmem_limit_bytes=vmem_limit),
        )

    args = (points, w1t, b1p, w2t, b2p, w_conv_v)
    if use_buffered:
        try:
            return build(True)(*args)
        except Exception:
            pass  # fall back to default double-buffered invariant operands
    return build(False)(*args)


# ---------------------------------------------------------------------------
# Reference + demo
# ---------------------------------------------------------------------------
def _init_params(key, in_channel, n_points, r=2):
    """Deterministic synthetic parameters matching PointSRB.__init__ shapes."""
    nr = int(n_points / r)
    ks = jax.random.split(key, 6)
    w_conv = jax.random.uniform(ks[0], (1, in_channel, 1), jnp.float32, -0.5, 0.5)
    b_conv = jax.random.uniform(ks[1], (1,), jnp.float32, -0.5, 0.5)
    w1 = jax.random.uniform(ks[2], (nr, n_points), jnp.float32, -0.3, 0.3)
    b1 = jax.random.uniform(ks[3], (nr,), jnp.float32, -0.3, 0.3)
    w2 = jax.random.uniform(ks[4], (n_points, nr), jnp.float32, -0.3, 0.3)
    b2 = jax.random.uniform(ks[5], (n_points,), jnp.float32, -0.3, 0.3)
    return w_conv, b_conv, w1, b1, w2, b2


def _reference(points, w_conv, b_conv, w1, b1, w2, b2):
    """Pure-JAX f32 reference of the (intended) PointSRB forward."""
    wc = w_conv.reshape(1, -1)                                    # (1, C)
    mask = jnp.einsum('oc,bcn->bn', wc, points) + b_conv[0]       # (B, N)
    h = jax.nn.relu(mask @ w1.T + b1)                             # (B, Nr)
    m = jax.nn.sigmoid(h @ w2.T + b2)                             # (B, N)
    return points * m[:, None, :]


if __name__ == "__main__":
    key = jax.random.PRNGKey(0)

    # Config 1: the canonical small shapes.
    B, C, N, r = 2, 4, 16, 2
    k_x, k_p, key = jax.random.split(key, 3)
    points = jax.random.normal(k_x, (B, C, N), dtype=jnp.float32)
    raw = _init_params(k_p, C, N, r)
    ref = _reference(points, *raw)

    # 1a) f32 weights: strict numerical check vs the pure-JAX reference.
    params_f32 = prepare_params(*raw, weight_dtype=jnp.float32)
    out_f32 = jax.block_until_ready(point_srb(points, *params_f32))
    assert out_f32.shape == (B, C, N) and out_f32.dtype == jnp.float32
    assert jnp.allclose(out_f32, ref, atol=1e-5, rtol=1e-5), "f32 mismatch vs reference"

    # 1b) bf16 fc weights (halved weight DMA / ~2x MXU), f32 accumulation.
    params_bf16 = prepare_params(*raw, weight_dtype=jnp.bfloat16)
    out_bf16 = jax.block_until_ready(point_srb(points, *params_bf16))
    assert out_bf16.shape == (B, C, N)
    assert jnp.allclose(out_bf16, ref, atol=1e-1, rtol=1e-1), "bf16 mismatch vs reference"

    # Config 2: unaligned B / C / N / Nr — exercises the no-pad (full-dim block)
    # path, C sublane padding, and the Nr lane padding, all exact.
    B2, C2, N2, r2 = 3, 5, 20, 2
    k_x2, k_p2, key = jax.random.split(key, 3)
    points2 = jax.random.normal(k_x2, (B2, C2, N2), dtype=jnp.float32)
    raw2 = _init_params(k_p2, C2, N2, r2)
    ref2 = _reference(points2, *raw2)
    params2 = prepare_params(*raw2, weight_dtype=jnp.float32)
    out2 = jax.block_until_ready(point_srb(points2, *params2))
    assert out2.shape == (B2, C2, N2)
    assert jnp.allclose(out2, ref2, atol=1e-5, rtol=1e-5), "unaligned-shape mismatch"

    print("KERNEL_OK")
</pallas_src>

<mosaic_0001>
module attributes {stable_mosaic.version = 11 : i64} {
  func.func @_point_srb_kernel(%arg0: i32, %arg1: memref<2x4x16xf32, #tpu.memory_space<vmem>>, %arg2: memref<16x128xf32, #tpu.memory_space<vmem>>, %arg3: memref<1x128xf32, #tpu.memory_space<vmem>>, %arg4: memref<128x16xf32, #tpu.memory_space<vmem>>, %arg5: memref<1x16xf32, #tpu.memory_space<vmem>>, %arg6: memref<4xf32, #tpu.memory_space<smem>>, %arg7: memref<2x4x16xf32, #tpu.memory_space<vmem>>) attributes {dimension_semantics = [#tpu.dimension_semantics<parallel>], iteration_bounds = array<i64: 1>, scalar_prefetch = 0 : i64, scratch_operands = 0 : i64, tpu.core_type = #tpu.core_type<tc>, window_params = [{transform_indices = @transform_0, window_bounds = array<i64: 2, 4, 16>}, {pipeline_mode = #tpu.pipeline_mode<synchronous>, transform_indices = @transform_1, window_bounds = array<i64: 16, 128>}, {pipeline_mode = #tpu.pipeline_mode<synchronous>, transform_indices = @transform_2, window_bounds = array<i64: 1, 128>}, {pipeline_mode = #tpu.pipeline_mode<synchronous>, transform_indices = @transform_3, window_bounds = array<i64: 128, 16>}, {pipeline_mode = #tpu.pipeline_mode<synchronous>, transform_indices = @transform_4, window_bounds = array<i64: 1, 16>}, {transform_indices = @transform_5, window_bounds = array<i64: 4>}, {transform_indices = @transform_6, window_bounds = array<i64: 2, 4, 16>}]} {
    %c0 = arith.constant 0 : index
    %c0_0 = arith.constant 0 : index
    %c0_1 = arith.constant 0 : index
    %0 = vector.load %arg1[%c0, %c0_0, %c0_1] : memref<2x4x16xf32, #tpu.memory_space<vmem>>, vector<2x4x16xf32>
    %1 = vector.extract_strided_slice %0 {offsets = [0, 0, 0], sizes = [2, 1, 16], strides = [1, 1, 1]} : vector<2x4x16xf32> to vector<2x1x16xf32>
    %2 = vector.shape_cast %1 : vector<2x1x16xf32> to vector<2x16xf32>
    %c0_2 = arith.constant 0 : index
    %3 = memref.load %arg6[%c0_2] : memref<4xf32, #tpu.memory_space<smem>>
    %4 = vector.broadcast %3 : f32 to vector<2x16xf32>
    %5 = arith.mulf %2, %4 : vector<2x16xf32>
    %6 = vector.extract_strided_slice %0 {offsets = [0, 1, 0], sizes = [2, 1, 16], strides = [1, 1, 1]} : vector<2x4x16xf32> to vector<2x1x16xf32>
    %7 = vector.shape_cast %6 : vector<2x1x16xf32> to vector<2x16xf32>
    %c1 = arith.constant 1 : index
    %8 = memref.load %arg6[%c1] : memref<4xf32, #tpu.memory_space<smem>>
    %9 = vector.broadcast %8 : f32 to vector<2x16xf32>
    %10 = arith.mulf %7, %9 : vector<2x16xf32>
    %11 = arith.addf %5, %10 : vector<2x16xf32>
    %12 = vector.extract_strided_slice %0 {offsets = [0, 2, 0], sizes = [2, 1, 16], strides = [1, 1, 1]} : vector<2x4x16xf32> to vector<2x1x16xf32>
    %13 = vector.shape_cast %12 : vector<2x1x16xf32> to vector<2x16xf32>
    %c2 = arith.constant 2 : index
    %14 = memref.load %arg6[%c2] : memref<4xf32, #tpu.memory_space<smem>>
    %15 = vector.broadcast %14 : f32 to vector<2x16xf32>
    %16 = arith.mulf %13, %15 : vector<2x16xf32>
    %17 = arith.addf %11, %16 : vector<2x16xf32>
    %18 = vector.extract_strided_slice %0 {offsets = [0, 3, 0], sizes = [2, 1, 16], strides = [1, 1, 1]} : vector<2x4x16xf32> to vector<2x1x16xf32>
    %19 = vector.shape_cast %18 : vector<2x1x16xf32> to vector<2x16xf32>
    %c3 = arith.constant 3 : index
    %20 = memref.load %arg6[%c3] : memref<4xf32, #tpu.memory_space<smem>>
    %21 = vector.broadcast %20 : f32 to vector<2x16xf32>
    %22 = arith.mulf %19, %21 : vector<2x16xf32>
    %23 = arith.addf %17, %22 : vector<2x16xf32>
    %c0_3 = arith.constant 0 : index
    %c0_4 = arith.constant 0 : index
    %24 = vector.load %arg2[%c0_3, %c0_4] : memref<16x128xf32, #tpu.memory_space<vmem>>, vector<16x128xf32>
    %cst = arith.constant dense<0.000000e+00> : vector<2x128xf32>
    %25 = tpu.matmul %23, %24, %cst {dimension_numbers = #tpu.dot_dimension_numbers<[1], [0], [0], [1], [0, 0, 1, 1], [], []>} : vector<2x16xf32>, vector<16x128xf32>, vector<2x128xf32> -> vector<2x128xf32>
    %c0_5 = arith.constant 0 : index
    %c0_6 = arith.constant 0 : index
    %26 = vector.load %arg3[%c0_5, %c0_6] : memref<1x128xf32, #tpu.memory_space<vmem>>, vector<1x128xf32>
    %27 = vector.broadcast %26 : vector<1x128xf32> to vector<2x128xf32>
    %28 = arith.addf %25, %27 : vector<2x128xf32>
    %cst_7 = arith.constant 0.000000e+00 : f32
    %29 = vector.broadcast %cst_7 : f32 to vector<2x128xf32>
    %30 = arith.maximumf %28, %29 : vector<2x128xf32>
    %c0_8 = arith.constant 0 : index
    %c0_9 = arith.constant 0 : index
    %31 = vector.load %arg4[%c0_8, %c0_9] : memref<128x16xf32, #tpu.memory_space<vmem>>, vector<128x16xf32>
    %cst_10 = arith.constant dense<0.000000e+00> : vector<2x16xf32>
    %32 = tpu.matmul %30, %31, %cst_10 {dimension_numbers = #tpu.dot_dimension_numbers<[1], [0], [0], [1], [0, 0, 1, 1], [], []>} : vector<2x128xf32>, vector<128x16xf32>, vector<2x16xf32> -> vector<2x16xf32>
    %c0_11 = arith.constant 0 : index
    %c0_12 = arith.constant 0 : index
    %33 = vector.load %arg5[%c0_11, %c0_12] : memref<1x16xf32, #tpu.memory_space<vmem>>, vector<1x16xf32>
    %34 = vector.broadcast %33 : vector<1x16xf32> to vector<2x16xf32>
    %35 = arith.addf %32, %34 : vector<2x16xf32>
    %36 = arith.negf %35 : vector<2x16xf32>
    %37 = math.exp %36 : vector<2x16xf32>
    %cst_13 = arith.constant 1.000000e+00 : f32
    %38 = vector.broadcast %cst_13 : f32 to vector<2x16xf32>
    %39 = arith.addf %38, %37 : vector<2x16xf32>
    %40 = arith.divf %38, %39 : vector<2x16xf32>
    %41 = vector.shape_cast %40 : vector<2x16xf32> to vector<2x1x16xf32>
    %42 = vector.broadcast %41 : vector<2x1x16xf32> to vector<2x4x16xf32>
    %43 = arith.mulf %0, %42 : vector<2x4x16xf32>
    %c0_14 = arith.constant 0 : index
    %c0_15 = arith.constant 0 : index
    %c0_16 = arith.constant 0 : index
    %44 = vector.load %arg7[%c0_14, %c0_15, %c0_16] : memref<2x4x16xf32, #tpu.memory_space<vmem>>, vector<2x4x16xf32>
    tpu.vector_store %arg7[%c0_14, %c0_15, %c0_16], %43 {strides = array<i32>} : memref<2x4x16xf32, #tpu.memory_space<vmem>>, vector<2x4x16xf32>,
    return
  }
  func.func @transform_0(%arg0: i32) -> (i32, i32, i32) {
    %c0_i32 = arith.constant 0 : i32
    %c0_i32_0 = arith.constant 0 : i32
    %c0_i32_1 = arith.constant 0 : i32
    return %arg0, %c0_i32, %c0_i32_0 : i32, i32, i32
  }
  func.func @transform_1(%arg0: i32) -> (i32, i32) {
    %c0_i32 = arith.constant 0 : i32
    %c0_i32_0 = arith.constant 0 : i32
    %c0_i32_1 = arith.constant 0 : i32
    return %c0_i32, %c0_i32_0 : i32, i32
  }
  func.func @transform_2(%arg0: i32) -> (i32, i32) {
    %c0_i32 = arith.constant 0 : i32
    %c0_i32_0 = arith.constant 0 : i32
    %c0_i32_1 = arith.constant 0 : i32
    return %c0_i32, %c0_i32_0 : i32, i32
  }
  func.func @transform_3(%arg0: i32) -> (i32, i32) {
    %c0_i32 = arith.constant 0 : i32
    %c0_i32_0 = arith.constant 0 : i32
    %c0_i32_1 = arith.constant 0 : i32
    return %c0_i32, %c0_i32_0 : i32, i32
  }
  func.func @transform_4(%arg0: i32) -> (i32, i32) {
    %c0_i32 = arith.constant 0 : i32
    %c0_i32_0 = arith.constant 0 : i32
    %c0_i32_1 = arith.constant 0 : i32
    return %c0_i32, %c0_i32_0 : i32, i32
  }
  func.func @transform_5(%arg0: i32) -> i32 {
    %c0_i32 = arith.constant 0 : i32
    %c0_i32_0 = arith.constant 0 : i32
    return %c0_i32 : i32
  }
  func.func @transform_6(%arg0: i32) -> (i32, i32, i32) {
    %c0_i32 = arith.constant 0 : i32
    %c0_i32_0 = arith.constant 0 : i32
    %c0_i32_1 = arith.constant 0 : i32
    return %arg0, %c0_i32, %c0_i32_0 : i32, i32, i32
  }
}

module attributes {stable_mosaic.version = 11 : i64} {
  func.func @_point_srb_kernel(%arg0: i32, %arg1: memref<2x4x16xf32, #tpu.memory_space<vmem>>, %arg2: memref<16x128xf32, #tpu.memory_space<vmem>>, %arg3: memref<1x128xf32, #tpu.memory_space<vmem>>, %arg4: memref<128x16xf32, #tpu.memory_space<vmem>>, %arg5: memref<1x16xf32, #tpu.memory_space<vmem>>, %arg6: memref<4xf32, #tpu.memory_space<smem>>, %arg7: memref<2x4x16xf32, #tpu.memory_space<vmem>>) attributes {dimension_semantics = [#tpu.dimension_semantics<parallel>], iteration_bounds = array<i64: 1>, scalar_prefetch = 0 : i64, scratch_operands = 0 : i64, tpu.core_type = #tpu.core_type<tc>, window_params = [{transform_indices = @transform_0, window_bounds = array<i64: 2, 4, 16>}, {pipeline_mode = #tpu.pipeline_mode<synchronous>, transform_indices = @transform_1, window_bounds = array<i64: 16, 128>}, {pipeline_mode = #tpu.pipeline_mode<synchronous>, transform_indices = @transform_2, window_bounds = array<i64: 1, 128>}, {pipeline_mode = #tpu.pipeline_mode<synchronous>, transform_indices = @transform_3, window_bounds = array<i64: 128, 16>}, {pipeline_mode = #tpu.pipeline_mode<synchronous>, transform_indices = @transform_4, window_bounds = array<i64: 1, 16>}, {transform_indices = @transform_5, window_bounds = array<i64: 4>}, {transform_indices = @transform_6, window_bounds = array<i64: 2, 4, 16>}]} {
    %c0 = arith.constant 0 : index
    %c0_0 = arith.constant 0 : index
    %c0_1 = arith.constant 0 : index
    %0 = vector.load %arg1[%c0, %c0_0, %c0_1] : memref<2x4x16xf32, #tpu.memory_space<vmem>>, vector<2x4x16xf32>
    %1 = vector.extract_strided_slice %0 {offsets = [0, 0, 0], sizes = [2, 1, 16], strides = [1, 1, 1]} : vector<2x4x16xf32> to vector<2x1x16xf32>
    %2 = vector.shape_cast %1 : vector<2x1x16xf32> to vector<2x16xf32>
    %c0_2 = arith.constant 0 : index
    %3 = memref.load %arg6[%c0_2] : memref<4xf32, #tpu.memory_space<smem>>
    %4 = vector.broadcast %3 : f32 to vector<2x16xf32>
    %5 = arith.mulf %2, %4 : vector<2x16xf32>
    %6 = vector.extract_strided_slice %0 {offsets = [0, 1, 0], sizes = [2, 1, 16], strides = [1, 1, 1]} : vector<2x4x16xf32> to vector<2x1x16xf32>
    %7 = vector.shape_cast %6 : vector<2x1x16xf32> to vector<2x16xf32>
    %c1 = arith.constant 1 : index
    %8 = memref.load %arg6[%c1] : memref<4xf32, #tpu.memory_space<smem>>
    %9 = vector.broadcast %8 : f32 to vector<2x16xf32>
    %10 = arith.mulf %7, %9 : vector<2x16xf32>
    %11 = arith.addf %5, %10 : vector<2x16xf32>
    %12 = vector.extract_strided_slice %0 {offsets = [0, 2, 0], sizes = [2, 1, 16], strides = [1, 1, 1]} : vector<2x4x16xf32> to vector<2x1x16xf32>
    %13 = vector.shape_cast %12 : vector<2x1x16xf32> to vector<2x16xf32>
    %c2 = arith.constant 2 : index
    %14 = memref.load %arg6[%c2] : memref<4xf32, #tpu.memory_space<smem>>
    %15 = vector.broadcast %14 : f32 to vector<2x16xf32>
    %16 = arith.mulf %13, %15 : vector<2x16xf32>
    %17 = arith.addf %11, %16 : vector<2x16xf32>
    %18 = vector.extract_strided_slice %0 {offsets = [0, 3, 0], sizes = [2, 1, 16], strides = [1, 1, 1]} : vector<2x4x16xf32> to vector<2x1x16xf32>
    %19 = vector.shape_cast %18 : vector<2x1x16xf32> to vector<2x16xf32>
    %c3 = arith.constant 3 : index
    %20 = memref.load %arg6[%c3] : memref<4xf32, #tpu.memory_space<smem>>
    %21 = vector.broadcast %20 : f32 to vector<2x16xf32>
    %22 = arith.mulf %19, %21 : vector<2x16xf32>
    %23 = arith.addf %17, %22 : vector<2x16xf32>
    %c0_3 = arith.constant 0 : index
    %c0_4 = arith.constant 0 : index
    %24 = vector.load %arg2[%c0_3, %c0_4] : memref<16x128xf32, #tpu.memory_space<vmem>>, vector<16x128xf32>
    %cst = arith.constant dense<0.000000e+00> : vector<2x128xf32>
    %25 = tpu.matmul %23, %24, %cst {dimension_numbers = #tpu.dot_dimension_numbers<[1], [0], [0], [1], [0, 0, 1, 1], [], []>} : vector<2x16xf32>, vector<16x128xf32>, vector<2x128xf32> -> vector<2x128xf32>
    %c0_5 = arith.constant 0 : index
    %c0_6 = arith.constant 0 : index
    %26 = vector.load %arg3[%c0_5, %c0_6] : memref<1x128xf32, #tpu.memory_space<vmem>>, vector<1x128xf32>
    %27 = vector.broadcast %26 : vector<1x128xf32> to vector<2x128xf32>
    %28 = arith.addf %25, %27 : vector<2x128xf32>
    %cst_7 = arith.constant 0.000000e+00 : f32
    %29 = vector.broadcast %cst_7 : f32 to vector<2x128xf32>
    %30 = arith.maximumf %28, %29 : vector<2x128xf32>
    %c0_8 = arith.constant 0 : index
    %c0_9 = arith.constant 0 : index
    %31 = vector.load %arg4[%c0_8, %c0_9] : memref<128x16xf32, #tpu.memory_space<vmem>>, vector<128x16xf32>
    %cst_10 = arith.constant dense<0.000000e+00> : vector<2x16xf32>
    %32 = tpu.matmul %30, %31, %cst_10 {dimension_numbers = #tpu.dot_dimension_numbers<[1], [0], [0], [1], [0, 0, 1, 1], [], []>} : vector<2x128xf32>, vector<128x16xf32>, vector<2x16xf32> -> vector<2x16xf32>
    %c0_11 = arith.constant 0 : index
    %c0_12 = arith.constant 0 : index
    %33 = vector.load %arg5[%c0_11, %c0_12] : memref<1x16xf32, #tpu.memory_space<vmem>>, vector<1x16xf32>
    %34 = vector.broadcast %33 : vector<1x16xf32> to vector<2x16xf32>
    %35 = arith.addf %32, %34 : vector<2x16xf32>
    %36 = arith.negf %35 : vector<2x16xf32>
    %37 = math.exp %36 : vector<2x16xf32>
    %cst_13 = arith.constant 1.000000e+00 : f32
    %38 = vector.broadcast %cst_13 : f32 to vector<2x16xf32>
    %39 = arith.addf %38, %37 : vector<2x16xf32>
    %40 = arith.divf %38, %39 : vector<2x16xf32>
    %41 = vector.shape_cast %40 : vector<2x16xf32> to vector<2x1x16xf32>
    %42 = vector.broadcast %41 : vector<2x1x16xf32> to vector<2x4x16xf32>
    %43 = arith.mulf %0, %42 : vector<2x4x16xf32>
    %c0_14 = arith.constant 0 : index
    %c0_15 = arith.constant 0 : index
    %c0_16 = arith.constant 0 : index
    %44 = vector.load %arg7[%c0_14, %c0_15, %c0_16] : memref<2x4x16xf32, #tpu.memory_space<vmem>>, vector<2x4x16xf32>
    tpu.vector_store %arg7[%c0_14, %c0_15, %c0_16], %43 {strides = array<i32>} : memref<2x4x16xf32, #tpu.memory_space<vmem>>, vector<2x4x16xf32>,
    return
  }
  func.func @transform_0(%arg0: i32) -> (i32, i32, i32) {
    %c0_i32 = arith.constant 0 : i32
    %c0_i32_0 = arith.constant 0 : i32
    %c0_i32_1 = arith.constant 0 : i32
    return %arg0, %c0_i32, %c0_i32_0 : i32, i32, i32
  }
  func.func @transform_1(%arg0: i32) -> (i32, i32) {
    %c0_i32 = arith.constant 0 : i32
    %c0_i32_0 = arith.constant 0 : i32
    %c0_i32_1 = arith.constant 0 : i32
    return %c0_i32, %c0_i32_0 : i32, i32
  }
  func.func @transform_2(%arg0: i32) -> (i32, i32) {
    %c0_i32 = arith.constant 0 : i32
    %c0_i32_0 = arith.constant 0 : i32
    %c0_i32_1 = arith.constant 0 : i32
    return %c0_i32, %c0_i32_0 : i32, i32
  }
  func.func @transform_3(%arg0: i32) -> (i32, i32) {
    %c0_i32 = arith.constant 0 : i32
    %c0_i32_0 = arith.constant 0 : i32
    %c0_i32_1 = arith.constant 0 : i32
    return %c0_i32, %c0_i32_0 : i32, i32
  }
  func.func @transform_4(%arg0: i32) -> (i32, i32) {
    %c0_i32 = arith.constant 0 : i32
    %c0_i32_0 = arith.constant 0 : i32
    %c0_i32_1 = arith.constant 0 : i32
    return %c0_i32, %c0_i32_0 : i32, i32
  }
  func.func @transform_5(%arg0: i32) -> i32 {
    %c0_i32 = arith.constant 0 : i32
    %c0_i32_0 = arith.constant 0 : i32
    return %c0_i32 : i32
  }
  func.func @transform_6(%arg0: i32) -> (i32, i32, i32) {
    %c0_i32 = arith.constant 0 : i32
    %c0_i32_0 = arith.constant 0 : i32
    %c0_i32_1 = arith.constant 0 : i32
    return %arg0, %c0_i32, %c0_i32_0 : i32, i32, i32
  }
}

</mosaic_0001>

<llo_original>
// kernel: tpu_custom_call.1
$region0: #{tpu_custom_call.1}
  #allocation0 [shape = 'u32[]', space=smem, size = 0x4, offset = 0x4, fixed_abs, tag = 'smem constant byte address 0x4 - core index']
  #allocation1 [shape = 'u32[144,128]{1,0:T(1,128)}', space=vmem, size = 0x12000, scoped, tag = 'internal scratch']
  %s0 = inlined_call_operand.vmem [shape: f32[2,4,16], index: 0, kind: input, shape index: {}]
  %s1 = inlined_call_operand.vmem [shape: f32[16,128], index: 1, kind: input, shape index: {}]
  %s2 = inlined_call_operand.vmem [shape: f32[1,128], index: 2, kind: input, shape index: {}]
  %s3 = inlined_call_operand.vmem [shape: f32[128,16], index: 3, kind: input, shape index: {}]
  %s4 = inlined_call_operand.vmem [shape: f32[1,16], index: 4, kind: input, shape index: {}]
  %s5 = inlined_call_operand.vmem [shape: f32[4], index: 5, kind: input, shape index: {}]
  %s6 = inlined_call_operand.hbm [shape: f32[2,4,16], index: 6, kind: output, shape index: {}]
  %s7 = sld [smem:[#allocation0]]
  $region38: #{tpu_custom_call.1} parent=0
    _
  %s9 = ssub.s32 1, %s7
  %s10 = scalar_select 0, %s9, %s7
  $region1: #{tpu_custom_call.1} parent=0
    #allocation2 [shape = 'u8[512]{0}', space=smem, size = 0x200, scoped, tag = 'input window, operand 5, single buffered']
    #allocation3 [shape = 's32[1]{0}', space=sflag, size = 0x4, scoped, tag = 'scoped memory for tpu_custom_call.1']
    #allocation4 [shape = 's32[1]{0}', space=sflag, size = 0x4, scoped, tag = 'scoped memory for tpu_custom_call.1']
    #allocation5 [shape = 'u8[4096]{0}', space=vmem, size = 0x1000, scoped, tag = 'output window, operand 0, single buffered']
    %11 = vsyncpa [#allocation4], 0
    %12 = vsyncpa [#allocation3], 0
    // Predicated region
    $region2: #{tpu_custom_call.1} parent=1 // pred_check
      _
    $region3: #{tpu_custom_call.1} parent=1 // pred_check_branch
      %14 = sbr.rel (0) target = $region5
    $region4: #{tpu_custom_call.1} parent=1 // pred_region
      _
    $region5: #{tpu_custom_call.1} parent=1 // pred_fallthru
      _
    // Predicated region
    $region6: #{tpu_custom_call.1} parent=1 // pred_check
      _
    $region7: #{tpu_custom_call.1} parent=1 // pred_check_branch
      %16 = sbr.rel (0) target = $region9
    $region8: #{tpu_custom_call.1} parent=1 // pred_region
      _
    $region9: #{tpu_custom_call.1} parent=1 // pred_fallthru
      _
    // Predicated region
    $region10: #{tpu_custom_call.1} parent=1 // pred_check
      _
    $region11: #{tpu_custom_call.1} parent=1 // pred_check_branch
      %18 = sbr.rel (0) target = $region13
    $region12: #{tpu_custom_call.1} parent=1 // pred_region
      _
    $region13: #{tpu_custom_call.1} parent=1 // pred_fallthru
      _
    // Predicated region
    $region14: #{tpu_custom_call.1} parent=1 // pred_check
      _
    $region15: #{tpu_custom_call.1} parent=1 // pred_check_branch
      %20 = sbr.rel (0) target = $region17
    $region16: #{tpu_custom_call.1} parent=1 // pred_region
      _
    $region17: #{tpu_custom_call.1} parent=1 // pred_fallthru
      _
    // Predicated region
    $region18: #{tpu_custom_call.1} parent=1 // pred_check
      _
    $region19: #{tpu_custom_call.1} parent=1 // pred_check_branch
      %22 = sbr.rel (0) target = $region21
    $region20: #{tpu_custom_call.1} parent=1 // pred_region
      _
    $region21: #{tpu_custom_call.1} parent=1 // pred_fallthru
      _
    // Predicated region
    $region22: #{tpu_custom_call.1} parent=1 // pred_check
      _
    $region23: #{tpu_custom_call.1} parent=1 // pred_check_branch
      %24 = sbr.rel (0) target = $region25
    $region24: #{tpu_custom_call.1} parent=1 // pred_region
      %s26 = ssub.s32 16, 16
      %27 = vsyncadd [#allocation4], %s26
      %s29 = sshll.u32 %s5, 4
      %s30 = int_to_ptr.vmem [resolvable:$true] %s29
      %32 = dma.vmem_to_smem %s30, 16, [#allocation2], [#allocation4]
    $region25: #{tpu_custom_call.1} parent=1 // pred_fallthru
      _
    // Predicated region
    $region26: #{tpu_custom_call.1} parent=1 // pred_check
      _
    $region27: #{tpu_custom_call.1} parent=1 // pred_check_branch
      %34 = sbr.rel (0) target = $region29
    $region28: #{tpu_custom_call.1} parent=1 // pred_region
      %35 = dma.done [#allocation4], 16
    $region29: #{tpu_custom_call.1} parent=1 // pred_fallthru
      _
    %36 = sfence
    %v37 = vld [vmem:[%s0] sm:$0xf]
    %v38 = vld [vmem:[%s0 + $0x4] sm:$0xf]
    %s39 = sld [smem:[#allocation2]]
    %v40 = vstv %s39
    %v41 = vmul.f32 %v37, %v40
    %v42 = vmul.f32 %v38, %v40
    %s43 = sld [smem:[#allocation2 + $0x1]]
    %v44 = vstv %s43
    %v45 = vmul.f32 %v37, %v44
    %v46 = vmul.f32 %v38, %v44
    %v49 = vrot.slane %v45, 1
    %v50 = vrot.slane %v46, 1
    %v53 = vadd.f32 %v41, %v49
    %v54 = vadd.f32 %v42, %v50
    %s55 = sld [smem:[#allocation2 + $0x2]]
    %v56 = vstv %s55
    %v57 = vmul.f32 %v37, %v56
    %v58 = vmul.f32 %v38, %v56
    %v61 = vrot.slane %v57, 2
    %v62 = vrot.slane %v58, 2
    %v65 = vadd.f32 %v53, %v61
    %v66 = vadd.f32 %v54, %v62
    %s67 = sld [smem:[#allocation2 + $0x3]]
    %v68 = vstv %s67
    %v69 = vmul.f32 %v37, %v68
    %v70 = vmul.f32 %v38, %v68
    %v73 = vrot.slane %v69, 3
    %v74 = vrot.slane %v70, 3
    %v77 = vadd.f32 %v65, %v73
    %v78 = vadd.f32 %v66, %v74
    %v79 = vld [vmem:[%s1] sm:$0xff]
    %v80 = vld [vmem:[%s1 + $0x8] sm:$0xff]
    %v81 = vld [vmem:[%s2] sm:$0x1]
    %v83 = vlaneseq
    %v84 = vshrl.u32 %v83, 7
    %v85 = vsub.s32 0, %v84
    %v86 = vrot.slane %v81, %v85
    %v90 = vrot.slane %v78, 7
    %vm91 = vcmask 1041409
    %v92 = vsel %vm91, %v90, %v77
    %vm93 = vcmask 130048
    %v94 = vsel %vm93, %v92, 0
    %96 = vmatprep.subr.mxu0 0.0
    %97 = vmatpush1.msra.mxu0 %v79
    %98 = vmatprep.subr.mxu0 0.0
    %99 = vmatpush1.msra.mxu0 %v80
    %100 = vmatprep.subr.mxu0 0.0
    %101 = vmatpush1.msra.mxu0 0.0
    %102 = vmatprep.subr.mxu0 0.0
    %103 = vmatpush1.msra.mxu0 0.0
    %104 = vmatprep.subr.mxu0 0.0
    %105 = vmatpush1.msra.mxu0 0.0
    %106 = vmatprep.subr.mxu0 0.0
    %107 = vmatpush1.msra.mxu0 0.0
    %108 = vmatprep.subr.mxu0 0.0
    %109 = vmatpush1.msra.mxu0 0.0
    %110 = vmatprep.subr.mxu0 0.0
    %111 = vmatpush1.msra.mxu0 0.0
    %112 = vmatprep.subr.mxu0 0.0
    %113 = vmatpush1.msra.mxu0 0.0
    %114 = vmatprep.subr.mxu0 0.0
    %115 = vmatpush1.msra.mxu0 0.0
    %116 = vmatprep.subr.mxu0 0.0
    %117 = vmatpush1.msra.mxu0 0.0
    %118 = vmatprep.subr.mxu0 0.0
    %119 = vmatpush1.msra.mxu0 0.0
    %120 = vmatprep.subr.mxu0 0.0
    %121 = vmatpush1.msra.mxu0 0.0
    %122 = vmatprep.subr.mxu0 0.0
    %123 = vmatpush1.msra.mxu0 0.0
    %124 = vmatprep.subr.mxu0 0.0
    %125 = vmatpush1.msra.mxu0 0.0
    %126 = vmatprep.subr.mxu0 0.0
    %127 = vmatpush1.msra.mxu0 0.0
    %128 = vmatprep.subr.mxu0 0.0
    %129 = vmatpush1.msra.mxu0 0.0
    %130 = vmatprep.subr.mxu0 0.0
    %131 = vmatpush1.msra.mxu0 0.0
    %132 = vmatprep.subr.mxu0 0.0
    %133 = vmatpush1.msra.mxu0 0.0
    %134 = vmatprep.subr.mxu0 0.0
    %135 = vmatpush1.msra.mxu0 0.0
    %136 = vmatprep.subr.mxu0 0.0
    %137 = vmatpush1.msra.mxu0 0.0
    %138 = vmatprep.subr.mxu0 0.0
    %139 = vmatpush1.msra.mxu0 0.0
    %140 = vmatprep.subr.mxu0 0.0
    %141 = vmatpush1.msra.mxu0 0.0
    %142 = vmatprep.subr.mxu0 0.0
    %143 = vmatpush1.msra.mxu0 0.0
    %144 = vmatprep.subr.mxu0 0.0
    %145 = vmatpush1.msra.mxu0 0.0
    %146 = vmatprep.subr.mxu0 0.0
    %147 = vmatpush1.msra.mxu0 0.0
    %148 = vmatprep.subr.mxu0 0.0
    %149 = vmatpush1.msra.mxu0 0.0
    %150 = vmatprep.subr.mxu0 0.0
    %151 = vmatpush1.msra.mxu0 0.0
    %152 = vmatprep.subr.mxu0 0.0
    %153 = vmatpush1.msra.mxu0 0.0
    %154 = vmatprep.subr.mxu0 0.0
    %155 = vmatpush1.msra.mxu0 0.0
    %156 = vmatprep.subr.mxu0 0.0
    %157 = vmatpush1.msra.mxu0 0.0
    %158 = vmatprep.subr.mxu0 0.0
    %159 = vmatpush1.msra.mxu0 0.0
    %160 = vmatprep.mubr.f32.mxu0 0.0
    %161 = vmatmul.mubr.f32.gmra.mrb[0].mxu0 %v94
    %v162 = vpop.f32.mrb[0].mxu0
    %v163 = vadd.f32 %v86, %v162
    %v164 = vpop.f32.mrb[0].mxu0
    %165 = vdwg.mxu0
    %v166 = vmax.f32 %v163, 0.0
    %v167 = vld [vmem:[%s3] sm:$0xff]
    %v168 = vld [vmem:[%s3 + $0x8] sm:$0xff]
    %v169 = vld [vmem:[%s3 + $0x10] sm:$0xff]
    %v170 = vld [vmem:[%s3 + $0x18] sm:$0xff]
    %v171 = vld [vmem:[%s3 + $0x20] sm:$0xff]
    %v172 = vld [vmem:[%s3 + $0x28] sm:$0xff]
    %v173 = vld [vmem:[%s3 + $0x30] sm:$0xff]
    %v174 = vld [vmem:[%s3 + $0x38] sm:$0xff]
    %v175 = vld [vmem:[%s3 + $0x40] sm:$0xff]
    %v176 = vld [vmem:[%s3 + $0x48] sm:$0xff]
    %v177 = vld [vmem:[%s3 + $0x50] sm:$0xff]
    %v178 = vld [vmem:[%s3 + $0x58] sm:$0xff]
    %v179 = vld [vmem:[%s3 + $0x60] sm:$0xff]
    %v180 = vld [vmem:[%s3 + $0x68] sm:$0xff]
    %v181 = vld [vmem:[%s3 + $0x70] sm:$0xff]
    %v182 = vld [vmem:[%s3 + $0x78] sm:$0xff]
    %v183 = vld [vmem:[%s4] sm:$0x1]
    %v185 = vlaneseq
    %v186 = vshrl.u32 %v185, 7
    %v187 = vsub.s32 0, %v186
    %v188 = vrot.slane %v183, %v187
    %190 = vmatprep.subr.mxu0 0.0
    %191 = vmatpush1.msra.mxu0 %v167
    %192 = vmatprep.subr.mxu0 0.0
    %193 = vmatpush1.msra.mxu0 %v168
    %194 = vmatprep.subr.mxu0 0.0
    %195 = vmatpush1.msra.mxu0 %v169
    %196 = vmatprep.subr.mxu0 0.0
    %197 = vmatpush1.msra.mxu0 %v170
    %198 = vmatprep.subr.mxu0 0.0
    %199 = vmatpush1.msra.mxu0 %v171
    %200 = vmatprep.subr.mxu0 0.0
    %201 = vmatpush1.msra.mxu0 %v172
    %202 = vmatprep.subr.mxu0 0.0
    %203 = vmatpush1.msra.mxu0 %v173
    %204 = vmatprep.subr.mxu0 0.0
    %205 = vmatpush1.msra.mxu0 %v174
    %206 = vmatprep.subr.mxu0 0.0
    %207 = vmatpush1.msra.mxu0 %v175
    %208 = vmatprep.subr.mxu0 0.0
    %209 = vmatpush1.msra.mxu0 %v176
    %210 = vmatprep.subr.mxu0 0.0
    %211 = vmatpush1.msra.mxu0 %v177
    %212 = vmatprep.subr.mxu0 0.0
    %213 = vmatpush1.msra.mxu0 %v178
    %214 = vmatprep.subr.mxu0 0.0
    %215 = vmatpush1.msra.mxu0 %v179
    %216 = vmatprep.subr.mxu0 0.0
    %217 = vmatpush1.msra.mxu0 %v180
    %218 = vmatprep.subr.mxu0 0.0
    %219 = vmatpush1.msra.mxu0 %v181
    %220 = vmatprep.subr.mxu0 0.0
    %221 = vmatpush1.msra.mxu0 %v182
    %222 = vmatprep.subr.mxu0 0.0
    %223 = vmatpush1.msra.mxu0 0.0
    %224 = vmatprep.subr.mxu0 0.0
    %225 = vmatpush1.msra.mxu0 0.0
    %226 = vmatprep.subr.mxu0 0.0
    %227 = vmatpush1.msra.mxu0 0.0
    %228 = vmatprep.subr.mxu0 0.0
    %229 = vmatpush1.msra.mxu0 0.0
    %230 = vmatprep.subr.mxu0 0.0
    %231 = vmatpush1.msra.mxu0 0.0
    %232 = vmatprep.subr.mxu0 0.0
    %233 = vmatpush1.msra.mxu0 0.0
    %234 = vmatprep.subr.mxu0 0.0
    %235 = vmatpush1.msra.mxu0 0.0
    %236 = vmatprep.subr.mxu0 0.0
    %237 = vmatpush1.msra.mxu0 0.0
    %238 = vmatprep.subr.mxu0 0.0
    %239 = vmatpush1.msra.mxu0 0.0
    %240 = vmatprep.subr.mxu0 0.0
    %241 = vmatpush1.msra.mxu0 0.0
    %242 = vmatprep.subr.mxu0 0.0
    %243 = vmatpush1.msra.mxu0 0.0
    %244 = vmatprep.subr.mxu0 0.0
    %245 = vmatpush1.msra.mxu0 0.0
    %246 = vmatprep.subr.mxu0 0.0
    %247 = vmatpush1.msra.mxu0 0.0
    %248 = vmatprep.subr.mxu0 0.0
    %249 = vmatpush1.msra.mxu0 0.0
    %250 = vmatprep.subr.mxu0 0.0
    %251 = vmatpush1.msra.mxu0 0.0
    %252 = vmatprep.subr.mxu0 0.0
    %253 = vmatpush1.msra.mxu0 0.0
    %254 = vmatprep.mubr.f32.mxu0 0.0
    %255 = vmatmul.mubr.f32.gmra.mrb[0].mxu0 %v166
    %v256 = vpop.f32.mrb[0].mxu0
    %v257 = vadd.f32 %v188, %v256
    %v258 = vpop.f32.mrb[0].mxu0
    %259 = vdwg.mxu0
    %v260 = vxor.u32 %v257, 2147483648
    %v261 = vmul.f32 %v260, 1.442695
    %v262 = vpow.pop %v261
    %v263 = vadd.f32 %v262, 1.0
    %v264 = vrcp.pop %v263
    %v265 = vmul.f32 1.0, %v264
    %v268 = vunpack.c.l.s4 1966171168
    %v269 = vunpack.c.0.s8 %v268
    %v270 = vlaneseq
    %v271 = vshrl.u32 %v270, 7
    %v272 = vsub.s32 %v269, %v271
    %v273 = vrot.slane %v265, %v272
    %v274 = vcombine.high %v273, %v273
    %v276 = vunpack.c.l.s4 1966171168
    %v277 = vunpack.c.0.s8 %v276
    %v278 = vlaneseq
    %v279 = vshrl.u32 %v278, 7
    %v280 = vsub.s32 %v277, %v279
    %v281 = vrot.slane %v273, %v280
    %v283 = vunpack.c.l.s4 1966171168
    %v284 = vunpack.c.0.s8 %v283
    %v285 = vlaneseq
    %v286 = vshrl.u32 %v285, 7
    %v287 = vsub.s32 %v284, %v286
    %v288 = vrot.slane %v274, %v287
    %v289 = vlaneseq
    %v290 = vshrl.u32 %v289, 7
    %v291 = vsub.s32 0, %v290
    %v292 = vrot.slane %v281, %v291
    %v293 = vlaneseq
    %v294 = vshrl.u32 %v293, 7
    %v295 = vsub.s32 0, %v294
    %v296 = vrot.slane %v288, %v295
    %v299 = vmul.f32 %v37, %v292
    %v300 = vmul.f32 %v38, %v296
    %vm301 = vcmask 125952
    %302 = vst.msk [vmem:[#allocation5] sm:$0xf] %vm301, %v299
    %303 = vst.msk [vmem:[#allocation5 + $0x4] sm:$0xf] %vm301, %v300
    // Predicated region
    $region30: #{tpu_custom_call.1} parent=1 // pred_check
      _
    $region31: #{tpu_custom_call.1} parent=1 // pred_check_branch
      %305 = sbr.rel (0) target = $region33
    $region32: #{tpu_custom_call.1} parent=1 // pred_region
      %s307 = ssub.s32 128, 128
      %308 = vsyncadd [#allocation3], %s307
      %s309 = sshll.u32 [#allocation5], 4
      %s310 = int_to_ptr.vmem [resolvable:$true] %s309
      %315 = dma.vmem_to_hbm [thread:$0]  %s310, 128, %s6, [#allocation3], 64, 64, 4
    $region33: #{tpu_custom_call.1} parent=1 // pred_fallthru
      _
    // Predicated region
    $region34: #{tpu_custom_call.1} parent=1 // pred_check
      _
    $region35: #{tpu_custom_call.1} parent=1 // pred_check_branch
      %317 = sbr.rel (0) target = $region37
    $region36: #{tpu_custom_call.1} parent=1 // pred_region
      %318 = dma.done [#allocation3], 128
    $region37: #{tpu_custom_call.1} parent=1 // pred_fallthru
      _
    %319 = vsyncpa [#allocation3], 1
    %320 = vsyncpa [#allocation4], 1

// kernel: tpu_custom_call.1
$region0: #{tpu_custom_call.1}
  #allocation0 [shape = 'u32[]', space=smem, size = 0x4, offset = 0x4, fixed_abs, tag = 'smem constant byte address 0x4 - core index']
  #allocation1 [shape = 'u32[144,128]{1,0:T(1,128)}', space=vmem, size = 0x12000, scoped, tag = 'internal scratch']
  %s0 = inlined_call_operand.vmem [shape: f32[2,4,16], index: 0, kind: input, shape index: {}]
  %s1 = inlined_call_operand.vmem [shape: f32[16,128], index: 1, kind: input, shape index: {}]
  %s2 = inlined_call_operand.vmem [shape: f32[1,128], index: 2, kind: input, shape index: {}]
  %s3 = inlined_call_operand.vmem [shape: f32[128,16], index: 3, kind: input, shape index: {}]
  %s4 = inlined_call_operand.vmem [shape: f32[1,16], index: 4, kind: input, shape index: {}]
  %s5 = inlined_call_operand.vmem [shape: f32[4], index: 5, kind: input, shape index: {}]
  %s6 = inlined_call_operand.hbm [shape: f32[2,4,16], index: 6, kind: output, shape index: {}]
  %s7 = sld [smem:[#allocation0]]
  $region38: #{tpu_custom_call.1} parent=0
    _
  %s9 = ssub.s32 1, %s7
  %s10 = scalar_select 0, %s9, %s7
  $region1: #{tpu_custom_call.1} parent=0
    #allocation2 [shape = 'u8[512]{0}', space=smem, size = 0x200, scoped, tag = 'input window, operand 5, single buffered']
    #allocation3 [shape = 's32[1]{0}', space=sflag, size = 0x4, scoped, tag = 'scoped memory for tpu_custom_call.1']
    #allocation4 [shape = 's32[1]{0}', space=sflag, size = 0x4, scoped, tag = 'scoped memory for tpu_custom_call.1']
    #allocation5 [shape = 'u8[4096]{0}', space=vmem, size = 0x1000, scoped, tag = 'output window, operand 0, single buffered']
    %11 = vsyncpa [#allocation4], 0
    %12 = vsyncpa [#allocation3], 0
    // Predicated region
    $region2: #{tpu_custom_call.1} parent=1 // pred_check
      _
    $region3: #{tpu_custom_call.1} parent=1 // pred_check_branch
      %14 = sbr.rel (0) target = $region5
    $region4: #{tpu_custom_call.1} parent=1 // pred_region
      _
    $region5: #{tpu_custom_call.1} parent=1 // pred_fallthru
      _
    // Predicated region
    $region6: #{tpu_custom_call.1} parent=1 // pred_check
      _
    $region7: #{tpu_custom_call.1} parent=1 // pred_check_branch
      %16 = sbr.rel (0) target = $region9
    $region8: #{tpu_custom_call.1} parent=1 // pred_region
      _
    $region9: #{tpu_custom_call.1} parent=1 // pred_fallthru
      _
    // Predicated region
    $region10: #{tpu_custom_call.1} parent=1 // pred_check
      _
    $region11: #{tpu_custom_call.1} parent=1 // pred_check_branch
      %18 = sbr.rel (0) target = $region13
    $region12: #{tpu_custom_call.1} parent=1 // pred_region
      _
    $region13: #{tpu_custom_call.1} parent=1 // pred_fallthru
      _
    // Predicated region
    $region14: #{tpu_custom_call.1} parent=1 // pred_check
      _
    $region15: #{tpu_custom_call.1} parent=1 // pred_check_branch
      %20 = sbr.rel (0) target = $region17
    $region16: #{tpu_custom_call.1} parent=1 // pred_region
      _
    $region17: #{tpu_custom_call.1} parent=1 // pred_fallthru
      _
    // Predicated region
    $region18: #{tpu_custom_call.1} parent=1 // pred_check
      _
    $region19: #{tpu_custom_call.1} parent=1 // pred_check_branch
      %22 = sbr.rel (0) target = $region21
    $region20: #{tpu_custom_call.1} parent=1 // pred_region
      _
    $region21: #{tpu_custom_call.1} parent=1 // pred_fallthru
      _
    // Predicated region
    $region22: #{tpu_custom_call.1} parent=1 // pred_check
      _
    $region23: #{tpu_custom_call.1} parent=1 // pred_check_branch
      %24 = sbr.rel (0) target = $region25
    $region24: #{tpu_custom_call.1} parent=1 // pred_region
      %s26 = ssub.s32 16, 16
      %27 = vsyncadd [#allocation4], %s26
      %s29 = sshll.u32 %s5, 4
      %s30 = int_to_ptr.vmem [resolvable:$true] %s29
      %32 = dma.vmem_to_smem %s30, 16, [#allocation2], [#allocation4]
    $region25: #{tpu_custom_call.1} parent=1 // pred_fallthru
      _
    // Predicated region
    $region26: #{tpu_custom_call.1} parent=1 // pred_check
      _
    $region27: #{tpu_custom_call.1} parent=1 // pred_check_branch
      %34 = sbr.rel (0) target = $region29
    $region28: #{tpu_custom_call.1} parent=1 // pred_region
      %35 = dma.done [#allocation4], 16
    $region29: #{tpu_custom_call.1} parent=1 // pred_fallthru
      _
    %36 = sfence
    %v37 = vld [vmem:[%s0] sm:$0xf]
    %v38 = vld [vmem:[%s0 + $0x4] sm:$0xf]
    %s39 = sld [smem:[#allocation2]]
    %v40 = vstv %s39
    %v41 = vmul.f32 %v37, %v40
    %v42 = vmul.f32 %v38, %v40
    %s43 = sld [smem:[#allocation2 + $0x1]]
    %v44 = vstv %s43
    %v45 = vmul.f32 %v37, %v44
    %v46 = vmul.f32 %v38, %v44
    %v49 = vrot.slane %v45, 1
    %v50 = vrot.slane %v46, 1
    %v53 = vadd.f32 %v41, %v49
    %v54 = vadd.f32 %v42, %v50
    %s55 = sld [smem:[#allocation2 + $0x2]]
    %v56 = vstv %s55
    %v57 = vmul.f32 %v37, %v56
    %v58 = vmul.f32 %v38, %v56
    %v61 = vrot.slane %v57, 2
    %v62 = vrot.slane %v58, 2
    %v65 = vadd.f32 %v53, %v61
    %v66 = vadd.f32 %v54, %v62
    %s67 = sld [smem:[#allocation2 + $0x3]]
    %v68 = vstv %s67
    %v69 = vmul.f32 %v37, %v68
    %v70 = vmul.f32 %v38, %v68
    %v73 = vrot.slane %v69, 3
    %v74 = vrot.slane %v70, 3
    %v77 = vadd.f32 %v65, %v73
    %v78 = vadd.f32 %v66, %v74
    %v79 = vld [vmem:[%s1] sm:$0xff]
    %v80 = vld [vmem:[%s1 + $0x8] sm:$0xff]
    %v81 = vld [vmem:[%s2] sm:$0x1]
    %v83 = vlaneseq
    %v84 = vshrl.u32 %v83, 7
    %v85 = vsub.s32 0, %v84
    %v86 = vrot.slane %v81, %v85
    %v90 = vrot.slane %v78, 7
    %vm91 = vcmask 1041409
    %v92 = vsel %vm91, %v90, %v77
    %vm93 = vcmask 130048
    %v94 = vsel %vm93, %v92, 0
    %96 = vmatprep.subr.mxu0 0.0
    %97 = vmatpush1.msra.mxu0 %v79
    %98 = vmatprep.subr.mxu0 0.0
    %99 = vmatpush1.msra.mxu0 %v80
    %100 = vmatprep.subr.mxu0 0.0
    %101 = vmatpush1.msra.mxu0 0.0
    %102 = vmatprep.subr.mxu0 0.0
    %103 = vmatpush1.msra.mxu0 0.0
    %104 = vmatprep.subr.mxu0 0.0
    %105 = vmatpush1.msra.mxu0 0.0
    %106 = vmatprep.subr.mxu0 0.0
    %107 = vmatpush1.msra.mxu0 0.0
    %108 = vmatprep.subr.mxu0 0.0
    %109 = vmatpush1.msra.mxu0 0.0
    %110 = vmatprep.subr.mxu0 0.0
    %111 = vmatpush1.msra.mxu0 0.0
    %112 = vmatprep.subr.mxu0 0.0
    %113 = vmatpush1.msra.mxu0 0.0
    %114 = vmatprep.subr.mxu0 0.0
    %115 = vmatpush1.msra.mxu0 0.0
    %116 = vmatprep.subr.mxu0 0.0
    %117 = vmatpush1.msra.mxu0 0.0
    %118 = vmatprep.subr.mxu0 0.0
    %119 = vmatpush1.msra.mxu0 0.0
    %120 = vmatprep.subr.mxu0 0.0
    %121 = vmatpush1.msra.mxu0 0.0
    %122 = vmatprep.subr.mxu0 0.0
    %123 = vmatpush1.msra.mxu0 0.0
    %124 = vmatprep.subr.mxu0 0.0
    %125 = vmatpush1.msra.mxu0 0.0
    %126 = vmatprep.subr.mxu0 0.0
    %127 = vmatpush1.msra.mxu0 0.0
    %128 = vmatprep.subr.mxu0 0.0
    %129 = vmatpush1.msra.mxu0 0.0
    %130 = vmatprep.subr.mxu0 0.0
    %131 = vmatpush1.msra.mxu0 0.0
    %132 = vmatprep.subr.mxu0 0.0
    %133 = vmatpush1.msra.mxu0 0.0
    %134 = vmatprep.subr.mxu0 0.0
    %135 = vmatpush1.msra.mxu0 0.0
    %136 = vmatprep.subr.mxu0 0.0
    %137 = vmatpush1.msra.mxu0 0.0
    %138 = vmatprep.subr.mxu0 0.0
    %139 = vmatpush1.msra.mxu0 0.0
    %140 = vmatprep.subr.mxu0 0.0
    %141 = vmatpush1.msra.mxu0 0.0
    %142 = vmatprep.subr.mxu0 0.0
    %143 = vmatpush1.msra.mxu0 0.0
    %144 = vmatprep.subr.mxu0 0.0
    %145 = vmatpush1.msra.mxu0 0.0
    %146 = vmatprep.subr.mxu0 0.0
    %147 = vmatpush1.msra.mxu0 0.0
    %148 = vmatprep.subr.mxu0 0.0
    %149 = vmatpush1.msra.mxu0 0.0
    %150 = vmatprep.subr.mxu0 0.0
    %151 = vmatpush1.msra.mxu0 0.0
    %152 = vmatprep.subr.mxu0 0.0
    %153 = vmatpush1.msra.mxu0 0.0
    %154 = vmatprep.subr.mxu0 0.0
    %155 = vmatpush1.msra.mxu0 0.0
    %156 = vmatprep.subr.mxu0 0.0
    %157 = vmatpush1.msra.mxu0 0.0
    %158 = vmatprep.subr.mxu0 0.0
    %159 = vmatpush1.msra.mxu0 0.0
    %160 = vmatprep.mubr.f32.mxu0 0.0
    %161 = vmatmul.mubr.f32.gmra.mrb[0].mxu0 %v94
    %v162 = vpop.f32.mrb[0].mxu0
    %v163 = vadd.f32 %v86, %v162
    %v164 = vpop.f32.mrb[0].mxu0
    %165 = vdwg.mxu0
    %v166 = vmax.f32 %v163, 0.0
    %v167 = vld [vmem:[%s3] sm:$0xff]
    %v168 = vld [vmem:[%s3 + $0x8] sm:$0xff]
    %v169 = vld [vmem:[%s3 + $0x10] sm:$0xff]
    %v170 = vld [vmem:[%s3 + $0x18] sm:$0xff]
    %v171 = vld [vmem:[%s3 + $0x20] sm:$0xff]
    %v172 = vld [vmem:[%s3 + $0x28] sm:$0xff]
    %v173 = vld [vmem:[%s3 + $0x30] sm:$0xff]
    %v174 = vld [vmem:[%s3 + $0x38] sm:$0xff]
    %v175 = vld [vmem:[%s3 + $0x40] sm:$0xff]
    %v176 = vld [vmem:[%s3 + $0x48] sm:$0xff]
    %v177 = vld [vmem:[%s3 + $0x50] sm:$0xff]
    %v178 = vld [vmem:[%s3 + $0x58] sm:$0xff]
    %v179 = vld [vmem:[%s3 + $0x60] sm:$0xff]
    %v180 = vld [vmem:[%s3 + $0x68] sm:$0xff]
    %v181 = vld [vmem:[%s3 + $0x70] sm:$0xff]
    %v182 = vld [vmem:[%s3 + $0x78] sm:$0xff]
    %v183 = vld [vmem:[%s4] sm:$0x1]
    %v185 = vlaneseq
    %v186 = vshrl.u32 %v185, 7
    %v187 = vsub.s32 0, %v186
    %v188 = vrot.slane %v183, %v187
    %190 = vmatprep.subr.mxu0 0.0
    %191 = vmatpush1.msra.mxu0 %v167
    %192 = vmatprep.subr.mxu0 0.0
    %193 = vmatpush1.msra.mxu0 %v168
    %194 = vmatprep.subr.mxu0 0.0
    %195 = vmatpush1.msra.mxu0 %v169
    %196 = vmatprep.subr.mxu0 0.0
    %197 = vmatpush1.msra.mxu0 %v170
    %198 = vmatprep.subr.mxu0 0.0
    %199 = vmatpush1.msra.mxu0 %v171
    %200 = vmatprep.subr.mxu0 0.0
    %201 = vmatpush1.msra.mxu0 %v172
    %202 = vmatprep.subr.mxu0 0.0
    %203 = vmatpush1.msra.mxu0 %v173
    %204 = vmatprep.subr.mxu0 0.0
    %205 = vmatpush1.msra.mxu0 %v174
    %206 = vmatprep.subr.mxu0 0.0
    %207 = vmatpush1.msra.mxu0 %v175
    %208 = vmatprep.subr.mxu0 0.0
    %209 = vmatpush1.msra.mxu0 %v176
    %210 = vmatprep.subr.mxu0 0.0
    %211 = vmatpush1.msra.mxu0 %v177
    %212 = vmatprep.subr.mxu0 0.0
    %213 = vmatpush1.msra.mxu0 %v178
    %214 = vmatprep.subr.mxu0 0.0
    %215 = vmatpush1.msra.mxu0 %v179
    %216 = vmatprep.subr.mxu0 0.0
    %217 = vmatpush1.msra.mxu0 %v180
    %218 = vmatprep.subr.mxu0 0.0
    %219 = vmatpush1.msra.mxu0 %v181
    %220 = vmatprep.subr.mxu0 0.0
    %221 = vmatpush1.msra.mxu0 %v182
    %222 = vmatprep.subr.mxu0 0.0
    %223 = vmatpush1.msra.mxu0 0.0
    %224 = vmatprep.subr.mxu0 0.0
    %225 = vmatpush1.msra.mxu0 0.0
    %226 = vmatprep.subr.mxu0 0.0
    %227 = vmatpush1.msra.mxu0 0.0
    %228 = vmatprep.subr.mxu0 0.0
    %229 = vmatpush1.msra.mxu0 0.0
    %230 = vmatprep.subr.mxu0 0.0
    %231 = vmatpush1.msra.mxu0 0.0
    %232 = vmatprep.subr.mxu0 0.0
    %233 = vmatpush1.msra.mxu0 0.0
    %234 = vmatprep.subr.mxu0 0.0
    %235 = vmatpush1.msra.mxu0 0.0
    %236 = vmatprep.subr.mxu0 0.0
    %237 = vmatpush1.msra.mxu0 0.0
    %238 = vmatprep.subr.mxu0 0.0
    %239 = vmatpush1.msra.mxu0 0.0
    %240 = vmatprep.subr.mxu0 0.0
    %241 = vmatpush1.msra.mxu0 0.0
    %242 = vmatprep.subr.mxu0 0.0
    %243 = vmatpush1.msra.mxu0 0.0
    %244 = vmatprep.subr.mxu0 0.0
    %245 = vmatpush1.msra.mxu0 0.0
    %246 = vmatprep.subr.mxu0 0.0
    %247 = vmatpush1.msra.mxu0 0.0
    %248 = vmatprep.subr.mxu0 0.0
    %249 = vmatpush1.msra.mxu0 0.0
    %250 = vmatprep.subr.mxu0 0.0
    %251 = vmatpush1.msra.mxu0 0.0
    %252 = vmatprep.subr.mxu0 0.0
    %253 = vmatpush1.msra.mxu0 0.0
    %254 = vmatprep.mubr.f32.mxu0 0.0
    %255 = vmatmul.mubr.f32.gmra.mrb[0].mxu0 %v166
    %v256 = vpop.f32.mrb[0].mxu0
    %v257 = vadd.f32 %v188, %v256
    %v258 = vpop.f32.mrb[0].mxu0
    %259 = vdwg.mxu0
    %v260 = vxor.u32 %v257, 2147483648
    %v261 = vmul.f32 %v260, 1.442695
    %v262 = vpow.pop %v261
    %v263 = vadd.f32 %v262, 1.0
    %v264 = vrcp.pop %v263
    %v265 = vmul.f32 1.0, %v264
    %v268 = vunpack.c.l.s4 1966171168
    %v269 = vunpack.c.0.s8 %v268
    %v270 = vlaneseq
    %v271 = vshrl.u32 %v270, 7
    %v272 = vsub.s32 %v269, %v271
    %v273 = vrot.slane %v265, %v272
    %v274 = vcombine.high %v273, %v273
    %v276 = vunpack.c.l.s4 1966171168
    %v277 = vunpack.c.0.s8 %v276
    %v278 = vlaneseq
    %v279 = vshrl.u32 %v278, 7
    %v280 = vsub.s32 %v277, %v279
    %v281 = vrot.slane %v273, %v280
    %v283 = vunpack.c.l.s4 1966171168
    %v284 = vunpack.c.0.s8 %v283
    %v285 = vlaneseq
    %v286 = vshrl.u32 %v285, 7
    %v287 = vsub.s32 %v284, %v286
    %v288 = vrot.slane %v274, %v287
    %v289 = vlaneseq
    %v290 = vshrl.u32 %v289, 7
    %v291 = vsub.s32 0, %v290
    %v292 = vrot.slane %v281, %v291
    %v293 = vlaneseq
    %v294 = vshrl.u32 %v293, 7
    %v295 = vsub.s32 0, %v294
    %v296 = vrot.slane %v288, %v295
    %v299 = vmul.f32 %v37, %v292
    %v300 = vmul.f32 %v38, %v296
    %vm301 = vcmask 125952
    %302 = vst.msk [vmem:[#allocation5] sm:$0xf] %vm301, %v299
    %303 = vst.msk [vmem:[#allocation5 + $0x4] sm:$0xf] %vm301, %v300
    // Predicated region
    $region30: #{tpu_custom_call.1} parent=1 // pred_check
      _
    $region31: #{tpu_custom_call.1} parent=1 // pred_check_branch
      %305 = sbr.rel (0) target = $region33
    $region32: #{tpu_custom_call.1} parent=1 // pred_region
      %s307 = ssub.s32 128, 128
      %308 = vsyncadd [#allocation3], %s307
      %s309 = sshll.u32 [#allocation5], 4
      %s310 = int_to_ptr.vmem [resolvable:$true] %s309
      %315 = dma.vmem_to_hbm [thread:$0]  %s310, 128, %s6, [#allocation3], 64, 64, 4
    $region33: #{tpu_custom_call.1} parent=1 // pred_fallthru
      _
    // Predicated region
    $region34: #{tpu_custom_call.1} parent=1 // pred_check
      _
    $region35: #{tpu_custom_call.1} parent=1 // pred_check_branch
      %317 = sbr.rel (0) target = $region37
    $region36: #{tpu_custom_call.1} parent=1 // pred_region
      %318 = dma.done [#allocation3], 128
    $region37: #{tpu_custom_call.1} parent=1 // pred_fallthru
      _
    %319 = vsyncpa [#allocation3], 1
    %320 = vsyncpa [#allocation4], 1

</llo_original>
